<compile_context>
chip_gen: v6e
topology: v6e:2x2x1
jax: 0.10.0
libtpu: 0.0.40
codegen_flags: <defaults>
</compile_context>

<pallas_src>
import jax
import jax.numpy as jnp
from jax.experimental import pallas as pl
from jax.experimental.pallas import tpu as pltpu

FEAT = 128       # lane-dense padded hidden/output width
TB_MAX = 2048    # max batch-tile rows (bf16 in + bf16 out tiles stay << VMEM)


def _round_up(x, m):
    return ((x + m - 1) // m) * m


def _make_kernel(in_pad):
    """Kernel closure over the (static) padded input width."""

    def mlp_kernel(x_ref, w_ref, b_ref, o_ref):
        # x_ref: (TB, in_pad) bf16
        # w_ref: (5, 128, 128) bf16  (layer 0 uses only its first in_pad K rows)
        # b_ref: (8, 128) f32        (rows 0..4 used)
        # o_ref: (TB, 128) bf16
        w1 = w_ref[0][:in_pad, :]                       # static slice, bf16-tile aligned
        h = jnp.dot(x_ref[...], w1, preferred_element_type=jnp.float32) + b_ref[0:1, :]
        h = jnp.maximum(h, 0.0).astype(jnp.bfloat16)

        for l in range(1, 4):                           # layers 2..4 (ReLU)
            h = jnp.dot(h, w_ref[l], preferred_element_type=jnp.float32) + b_ref[l:l + 1, :]
            h = jnp.maximum(h, 0.0).astype(jnp.bfloat16)

        # final layer, no ReLU
        h = jnp.dot(h, w_ref[4], preferred_element_type=jnp.float32) + b_ref[4:5, :]
        o_ref[...] = h.astype(o_ref.dtype)

    return mlp_kernel


def pack_params(params):
    """params: list of 5 (W [in,out] f32, b [out] f32), unpadded.

    Returns one (5,128,128) bf16 weight slab and one (8,128) f32 bias slab.
    """
    assert len(params) == 5
    w_slab = jnp.zeros((5, FEAT, FEAT), jnp.bfloat16)
    b_slab = jnp.zeros((8, FEAT), jnp.float32)
    for i, (w, b) in enumerate(params):
        fi, fo = w.shape
        assert fi <= FEAT and fo <= FEAT, "this kernel assumes all layer widths <= 128"
        w_slab = w_slab.at[i, :fi, :fo].set(w.astype(jnp.bfloat16))
        b_slab = b_slab.at[i, :fo].set(b)
    return w_slab, b_slab


def _pick_batch_tile(B):
    b16 = _round_up(max(B, 1), 16)            # bf16 sublane packing -> multiples of 16
    if b16 <= 256:
        tb = b16                              # tiny/small batch: one tile
    else:
        # >=2 grid steps (v7x has 2 TCs sharing the "parallel" axis), <=2048 rows
        tb = min(TB_MAX, _round_up((b16 + 1) // 2, 256))
    b_pad = _round_up(b16, tb)
    return tb, b_pad


def mlp_forward(x, w_slab, bias_slab, in_size, out_size, return_padded=False):
    """x: [B, in_size] (or [in_size]); returns [B, out_size] f32 (or the padded
    (b_pad,128) bf16 slab when return_padded=True, avoiding the slice pass)."""
    if x.ndim < 2:
        x = x[None, :]
    B = x.shape[0]

    in_pad = _round_up(in_size, 16)           # real input width, 16-lane aligned
    tb, b_pad = _pick_batch_tile(B)

    # Single padded bf16 copy of the input at its real width (no 4x inflation).
    xp = jnp.zeros((b_pad, in_pad), jnp.bfloat16).at[:B, :in_size].set(
        x.astype(jnp.bfloat16))

    grid = (b_pad // tb,)
    x_spec = pl.BlockSpec((tb, in_pad), lambda i: (i, 0))          # last dim == full dim
    w_spec = pl.BlockSpec(w_slab.shape, lambda i: (0, 0, 0))       # VMEM-resident weights
    b_spec = pl.BlockSpec(bias_slab.shape, lambda i: (0, 0))       # VMEM-resident biases

    out_padded = pl.pallas_call(
        _make_kernel(in_pad),
        out_shape=jax.ShapeDtypeStruct((b_pad, FEAT), jnp.bfloat16),
        grid=grid,
        in_specs=[x_spec, w_spec, b_spec],
        out_specs=pl.BlockSpec((tb, FEAT), lambda i: (i, 0)),
        compiler_params=pltpu.CompilerParams(
            dimension_semantics=("parallel",)),
    )(xp, w_slab, bias_slab)

    if return_padded:
        return out_padded
    # Module semantics: [B, out_size] float32. (Skip via return_padded=True when
    # the consumer can fuse/ignore the zero columns.)
    return out_padded[:B, :out_size].astype(jnp.float32)


def init_params(key, sizes):
    """Deterministic init matching nn.Linear shapes.

    sizes = [in, h1, h2, h3, h4, out]; weights stored [in, out], bias [out].
    """
    params = []
    for i in range(len(sizes) - 1):
        fan_in, fan_out = sizes[i], sizes[i + 1]
        key, kw, kb = jax.random.split(key, 3)
        bound = 1.0 / jnp.sqrt(fan_in)
        w = jax.random.uniform(kw, (fan_in, fan_out), jnp.float32, -bound, bound)
        b = jax.random.uniform(kb, (fan_out,), jnp.float32, -bound, bound)
        params.append((w, b))
    return params


def reference_forward(x, params):
    """Pure-JAX reference emulating the kernel's bf16-operand / f32-accumulate math."""
    if x.ndim < 2:
        x = x[None, :]
    h = x
    n = len(params)
    for i, (w, b) in enumerate(params):
        hb = h.astype(jnp.bfloat16).astype(jnp.float32)
        wb = w.astype(jnp.bfloat16).astype(jnp.float32)
        h = hb @ wb + b
        if i < n - 1:
            h = jnp.maximum(h, 0.0)
    return h


if __name__ == "__main__":
    # Small shapes: batch=8, in=32, h1=64, h2=64, h3=48, h4=64, out=16
    sizes = [32, 64, 64, 48, 64, 16]
    key = jax.random.PRNGKey(0)
    key, kx, kx2 = jax.random.split(key, 3)

    params = init_params(key, sizes)
    w_slab, bias_slab = pack_params(params)

    # Small-batch path (single tile).
    x = jax.random.normal(kx, (8, sizes[0]), jnp.float32)
    out = mlp_forward(x, w_slab, bias_slab, in_size=sizes[0], out_size=sizes[-1])
    out = jax.block_until_ready(out)
    ref = reference_forward(x, params)
    assert out.shape == ref.shape, (out.shape, ref.shape)
    assert jnp.allclose(out, ref, atol=1e-2, rtol=1e-2), "mismatch vs reference (small batch)"

    # Multi-tile path (2 grid steps) to exercise the batch tiling.
    x2 = jax.random.normal(kx2, (600, sizes[0]), jnp.float32)
    out2 = mlp_forward(x2, w_slab, bias_slab, in_size=sizes[0], out_size=sizes[-1])
    out2 = jax.block_until_ready(out2)
    ref2 = reference_forward(x2, params)
    assert out2.shape == ref2.shape, (out2.shape, ref2.shape)
    assert jnp.allclose(out2, ref2, atol=1e-2, rtol=1e-2), "mismatch vs reference (tiled batch)"

    print("KERNEL_OK")
</pallas_src>

<mosaic_0001>
module attributes {stable_mosaic.version = 11 : i64} {
  func.func @mlp_kernel(%arg0: i32, %arg1: memref<16x32xbf16, #tpu.memory_space<vmem>>, %arg2: memref<5x128x128xbf16, #tpu.memory_space<vmem>>, %arg3: memref<8x128xf32, #tpu.memory_space<vmem>>, %arg4: memref<16x128xbf16, #tpu.memory_space<vmem>>) attributes {dimension_semantics = [#tpu.dimension_semantics<parallel>], iteration_bounds = array<i64: 1>, scalar_prefetch = 0 : i64, scratch_operands = 0 : i64, tpu.core_type = #tpu.core_type<tc>, window_params = [{transform_indices = @transform_0, window_bounds = array<i64: 16, 32>}, {pipeline_mode = #tpu.pipeline_mode<synchronous>, transform_indices = @transform_1, window_bounds = array<i64: 5, 128, 128>}, {pipeline_mode = #tpu.pipeline_mode<synchronous>, transform_indices = @transform_2, window_bounds = array<i64: 8, 128>}, {transform_indices = @transform_3, window_bounds = array<i64: 16, 128>}]} {
    %c0 = arith.constant 0 : index
    %c0_0 = arith.constant 0 : index
    %c0_1 = arith.constant 0 : index
    %0 = vector.load %arg2[%c0, %c0_0, %c0_1] : memref<5x128x128xbf16, #tpu.memory_space<vmem>>, vector<1x128x128xbf16>
    %1 = vector.shape_cast %0 : vector<1x128x128xbf16> to vector<128x128xbf16>
    %2 = vector.extract_strided_slice %1 {offsets = [0, 0], sizes = [32, 128], strides = [1, 1]} : vector<128x128xbf16> to vector<32x128xbf16>
    %c0_2 = arith.constant 0 : index
    %c0_3 = arith.constant 0 : index
    %3 = vector.load %arg1[%c0_2, %c0_3] : memref<16x32xbf16, #tpu.memory_space<vmem>>, vector<16x32xbf16>
    %cst = arith.constant dense<0.000000e+00> : vector<16x128xf32>
    %4 = tpu.matmul %3, %2, %cst {dimension_numbers = #tpu.dot_dimension_numbers<[1], [0], [0], [1], [0, 0, 1, 1], [], []>} : vector<16x32xbf16>, vector<32x128xbf16>, vector<16x128xf32> -> vector<16x128xf32>
    %c0_4 = arith.constant 0 : index
    %c0_5 = arith.constant 0 : index
    %5 = vector.load %arg3[%c0_4, %c0_5] : memref<8x128xf32, #tpu.memory_space<vmem>>, vector<1x128xf32>
    %6 = vector.broadcast %5 : vector<1x128xf32> to vector<16x128xf32>
    %7 = arith.addf %4, %6 : vector<16x128xf32>
    %cst_6 = arith.constant 0.000000e+00 : f32
    %8 = vector.broadcast %cst_6 : f32 to vector<16x128xf32>
    %9 = arith.maximumf %7, %8 : vector<16x128xf32>
    %10 = arith.truncf %9 : vector<16x128xf32> to vector<16x128xbf16>
    %c1 = arith.constant 1 : index
    %c0_7 = arith.constant 0 : index
    %c0_8 = arith.constant 0 : index
    %11 = vector.load %arg2[%c1, %c0_7, %c0_8] : memref<5x128x128xbf16, #tpu.memory_space<vmem>>, vector<1x128x128xbf16>
    %12 = vector.shape_cast %11 : vector<1x128x128xbf16> to vector<128x128xbf16>
    %cst_9 = arith.constant dense<0.000000e+00> : vector<16x128xf32>
    %13 = tpu.matmul %10, %12, %cst_9 {dimension_numbers = #tpu.dot_dimension_numbers<[1], [0], [0], [1], [0, 0, 1, 1], [], []>} : vector<16x128xbf16>, vector<128x128xbf16>, vector<16x128xf32> -> vector<16x128xf32>
    %c1_10 = arith.constant 1 : index
    %c0_11 = arith.constant 0 : index
    %14 = vector.load %arg3[%c1_10, %c0_11] : memref<8x128xf32, #tpu.memory_space<vmem>>, vector<1x128xf32>
    %15 = vector.broadcast %14 : vector<1x128xf32> to vector<16x128xf32>
    %16 = arith.addf %13, %15 : vector<16x128xf32>
    %cst_12 = arith.constant 0.000000e+00 : f32
    %17 = vector.broadcast %cst_12 : f32 to vector<16x128xf32>
    %18 = arith.maximumf %16, %17 : vector<16x128xf32>
    %19 = arith.truncf %18 : vector<16x128xf32> to vector<16x128xbf16>
    %c2 = arith.constant 2 : index
    %c0_13 = arith.constant 0 : index
    %c0_14 = arith.constant 0 : index
    %20 = vector.load %arg2[%c2, %c0_13, %c0_14] : memref<5x128x128xbf16, #tpu.memory_space<vmem>>, vector<1x128x128xbf16>
    %21 = vector.shape_cast %20 : vector<1x128x128xbf16> to vector<128x128xbf16>
    %cst_15 = arith.constant dense<0.000000e+00> : vector<16x128xf32>
    %22 = tpu.matmul %19, %21, %cst_15 {dimension_numbers = #tpu.dot_dimension_numbers<[1], [0], [0], [1], [0, 0, 1, 1], [], []>} : vector<16x128xbf16>, vector<128x128xbf16>, vector<16x128xf32> -> vector<16x128xf32>
    %c2_16 = arith.constant 2 : index
    %c0_17 = arith.constant 0 : index
    %23 = vector.load %arg3[%c2_16, %c0_17] : memref<8x128xf32, #tpu.memory_space<vmem>>, vector<1x128xf32>
    %24 = vector.broadcast %23 : vector<1x128xf32> to vector<16x128xf32>
    %25 = arith.addf %22, %24 : vector<16x128xf32>
    %cst_18 = arith.constant 0.000000e+00 : f32
    %26 = vector.broadcast %cst_18 : f32 to vector<16x128xf32>
    %27 = arith.maximumf %25, %26 : vector<16x128xf32>
    %28 = arith.truncf %27 : vector<16x128xf32> to vector<16x128xbf16>
    %c3 = arith.constant 3 : index
    %c0_19 = arith.constant 0 : index
    %c0_20 = arith.constant 0 : index
    %29 = vector.load %arg2[%c3, %c0_19, %c0_20] : memref<5x128x128xbf16, #tpu.memory_space<vmem>>, vector<1x128x128xbf16>
    %30 = vector.shape_cast %29 : vector<1x128x128xbf16> to vector<128x128xbf16>
    %cst_21 = arith.constant dense<0.000000e+00> : vector<16x128xf32>
    %31 = tpu.matmul %28, %30, %cst_21 {dimension_numbers = #tpu.dot_dimension_numbers<[1], [0], [0], [1], [0, 0, 1, 1], [], []>} : vector<16x128xbf16>, vector<128x128xbf16>, vector<16x128xf32> -> vector<16x128xf32>
    %c3_22 = arith.constant 3 : index
    %c0_23 = arith.constant 0 : index
    %32 = vector.load %arg3[%c3_22, %c0_23] : memref<8x128xf32, #tpu.memory_space<vmem>>, vector<1x128xf32>
    %33 = vector.broadcast %32 : vector<1x128xf32> to vector<16x128xf32>
    %34 = arith.addf %31, %33 : vector<16x128xf32>
    %cst_24 = arith.constant 0.000000e+00 : f32
    %35 = vector.broadcast %cst_24 : f32 to vector<16x128xf32>
    %36 = arith.maximumf %34, %35 : vector<16x128xf32>
    %37 = arith.truncf %36 : vector<16x128xf32> to vector<16x128xbf16>
    %c4 = arith.constant 4 : index
    %c0_25 = arith.constant 0 : index
    %c0_26 = arith.constant 0 : index
    %38 = vector.load %arg2[%c4, %c0_25, %c0_26] : memref<5x128x128xbf16, #tpu.memory_space<vmem>>, vector<1x128x128xbf16>
    %39 = vector.shape_cast %38 : vector<1x128x128xbf16> to vector<128x128xbf16>
    %cst_27 = arith.constant dense<0.000000e+00> : vector<16x128xf32>
    %40 = tpu.matmul %37, %39, %cst_27 {dimension_numbers = #tpu.dot_dimension_numbers<[1], [0], [0], [1], [0, 0, 1, 1], [], []>} : vector<16x128xbf16>, vector<128x128xbf16>, vector<16x128xf32> -> vector<16x128xf32>
    %c4_28 = arith.constant 4 : index
    %c0_29 = arith.constant 0 : index
    %41 = vector.load %arg3[%c4_28, %c0_29] : memref<8x128xf32, #tpu.memory_space<vmem>>, vector<1x128xf32>
    %42 = vector.broadcast %41 : vector<1x128xf32> to vector<16x128xf32>
    %43 = arith.addf %40, %42 : vector<16x128xf32>
    %44 = arith.truncf %43 : vector<16x128xf32> to vector<16x128xbf16>
    %c0_30 = arith.constant 0 : index
    %c0_31 = arith.constant 0 : index
    %45 = vector.load %arg4[%c0_30, %c0_31] : memref<16x128xbf16, #tpu.memory_space<vmem>>, vector<16x128xbf16>
    tpu.vector_store %arg4[%c0_30, %c0_31], %44 {strides = array<i32>} : memref<16x128xbf16, #tpu.memory_space<vmem>>, vector<16x128xbf16>,
    return
  }
  func.func @transform_0(%arg0: i32) -> (i32, i32) {
    %c0_i32 = arith.constant 0 : i32
    %c0_i32_0 = arith.constant 0 : i32
    return %arg0, %c0_i32 : i32, i32
  }
  func.func @transform_1(%arg0: i32) -> (i32, i32, i32) {
    %c0_i32 = arith.constant 0 : i32
    %c0_i32_0 = arith.constant 0 : i32
    %c0_i32_1 = arith.constant 0 : i32
    %c0_i32_2 = arith.constant 0 : i32
    return %c0_i32, %c0_i32_0, %c0_i32_1 : i32, i32, i32
  }
  func.func @transform_2(%arg0: i32) -> (i32, i32) {
    %c0_i32 = arith.constant 0 : i32
    %c0_i32_0 = arith.constant 0 : i32
    %c0_i32_1 = arith.constant 0 : i32
    return %c0_i32, %c0_i32_0 : i32, i32
  }
  func.func @transform_3(%arg0: i32) -> (i32, i32) {
    %c0_i32 = arith.constant 0 : i32
    %c0_i32_0 = arith.constant 0 : i32
    return %arg0, %c0_i32 : i32, i32
  }
}

</mosaic_0001>

<llo_original>
// kernel: tpu_custom_call.1
$region0: #{tpu_custom_call.1}
  #allocation0 [shape = 'u32[]', space=smem, size = 0x4, offset = 0x4, fixed_abs, tag = 'smem constant byte address 0x4 - core index']
  #allocation1 [shape = 'u32[144,128]{1,0:T(1,128)}', space=vmem, size = 0x12000, scoped, tag = 'internal scratch']
  %s0 = inlined_call_operand.hbm [shape: bf16[16,32], index: 0, kind: input, shape index: {}]
  %s1 = inlined_call_operand.hbm [shape: bf16[5,128,128], index: 1, kind: input, shape index: {}]
  %s2 = inlined_call_operand.hbm [shape: f32[8,128], index: 2, kind: input, shape index: {}]
  %s3 = inlined_call_operand.hbm [shape: bf16[16,128], index: 3, kind: output, shape index: {}]
  %s4 = sld [smem:[#allocation0]]
  $region34: #{tpu_custom_call.1} parent=0
    _
  %s6 = ssub.s32 1, %s4
  %s7 = scalar_select 0, %s6, %s4
  $region1: #{tpu_custom_call.1} parent=0
    #allocation2 [shape = 'u8[4096]{0}', space=vmem, size = 0x1000, scoped, tag = 'input window, operand 0, single buffered']
    #allocation3 [shape = 's32[1]{0}', space=sflag, size = 0x4, scoped, tag = 'scoped memory for tpu_custom_call.1']
    #allocation4 [shape = 's32[1]{0}', space=sflag, size = 0x4, scoped, tag = 'scoped memory for tpu_custom_call.1']
    #allocation5 [shape = 'u8[163840]{0}', space=vmem, size = 0x28000, scoped, tag = 'input window, operand 1, single buffered']
    #allocation6 [shape = 's32[1]{0}', space=sflag, size = 0x4, scoped, tag = 'scoped memory for tpu_custom_call.1']
    #allocation7 [shape = 'u8[4096]{0}', space=vmem, size = 0x1000, scoped, tag = 'input window, operand 2, single buffered']
    #allocation8 [shape = 'u8[4096]{0}', space=vmem, size = 0x1000, scoped, tag = 'output window, operand 0, single buffered']
    %8 = vsyncpa [#allocation3], 0
    %9 = vsyncpa [#allocation6], 0
    %10 = vsyncpa [#allocation4], 0
    // Predicated region
    $region2: #{tpu_custom_call.1} parent=1 // pred_check
      _
    $region3: #{tpu_custom_call.1} parent=1 // pred_check_branch
      %12 = sbr.rel (0) target = $region5
    $region4: #{tpu_custom_call.1} parent=1 // pred_region
      %s14 = ssub.s32 128, 128
      %15 = vsyncadd [#allocation3], %s14
      %s16 = sshll.u32 [#allocation2], 4
      %s17 = int_to_ptr.vmem [resolvable:$true] %s16
      %22 = dma.hbm_to_vmem [thread:$0]  %s0, 128, %s17, [#allocation3], 64, 64, 4
    $region5: #{tpu_custom_call.1} parent=1 // pred_fallthru
      _
    // Predicated region
    $region6: #{tpu_custom_call.1} parent=1 // pred_check
      _
    $region7: #{tpu_custom_call.1} parent=1 // pred_check_branch
      %24 = sbr.rel (0) target = $region9
    $region8: #{tpu_custom_call.1} parent=1 // pred_region
      %s26 = ssub.s32 5120, 5120
      %27 = vsyncadd [#allocation6], %s26
      %s28 = sshll.u32 [#allocation5], 4
      %s29 = int_to_ptr.vmem [resolvable:$true] %s28
      %34 = dma.hbm_to_vmem [thread:$0]  %s1, 5120, %s29, [#allocation6], 64, 64, 4
    $region9: #{tpu_custom_call.1} parent=1 // pred_fallthru
      _
    // Predicated region
    $region10: #{tpu_custom_call.1} parent=1 // pred_check
      _
    $region11: #{tpu_custom_call.1} parent=1 // pred_check_branch
      %36 = sbr.rel (0) target = $region13
    $region12: #{tpu_custom_call.1} parent=1 // pred_region
      %s38 = ssub.s32 128, 128
      %39 = vsyncadd [#allocation6], %s38
      %s41 = sshll.u32 [#allocation7], 4
      %s42 = int_to_ptr.vmem [resolvable:$true] %s41
      %44 = dma.hbm_to_vmem [thread:$0]  %s2, 128, %s42, [#allocation6]
    $region13: #{tpu_custom_call.1} parent=1 // pred_fallthru
      _
    // Predicated region
    $region14: #{tpu_custom_call.1} parent=1 // pred_check
      _
    $region15: #{tpu_custom_call.1} parent=1 // pred_check_branch
      %46 = sbr.rel (0) target = $region17
    $region16: #{tpu_custom_call.1} parent=1 // pred_region
      %47 = dma.done [#allocation3], 128
    $region17: #{tpu_custom_call.1} parent=1 // pred_fallthru
      _
    // Predicated region
    $region18: #{tpu_custom_call.1} parent=1 // pred_check
      _
    $region19: #{tpu_custom_call.1} parent=1 // pred_check_branch
      %49 = sbr.rel (0) target = $region21
    $region20: #{tpu_custom_call.1} parent=1 // pred_region
      %50 = dma.done [#allocation6], 5120
    $region21: #{tpu_custom_call.1} parent=1 // pred_fallthru
      _
    // Predicated region
    $region22: #{tpu_custom_call.1} parent=1 // pred_check
      _
    $region23: #{tpu_custom_call.1} parent=1 // pred_check_branch
      %52 = sbr.rel (0) target = $region25
    $region24: #{tpu_custom_call.1} parent=1 // pred_region
      %53 = dma.done [#allocation6], 128
    $region25: #{tpu_custom_call.1} parent=1 // pred_fallthru
      _
    %v55 = vld [vmem:[#allocation5] sm:$0xf]
    %v56 = vld [vmem:[#allocation5 + $0x4] sm:$0xf]
    %v57 = vld [vmem:[#allocation5 + $0x8] sm:$0xf]
    %v58 = vld [vmem:[#allocation5 + $0xc] sm:$0xf]
    %v59 = vld [vmem:[#allocation2] sm:$0xf]
    %v60 = vld [vmem:[#allocation2 + $0x4] sm:$0xf]
    %v61 = vld [vmem:[#allocation7] sm:$0x1]
    %v62 = vlaneseq
    %v63 = vshrl.u32 %v62, 7
    %v64 = vsub.s32 0, %v63
    %v65 = vrot.slane %v61, %v64
    %v68 = vunpack.c.l.b16 %v59
    %v69 = vunpack.c.l.b16 %v60
    %v70 = vpack.c.b16 %v69, %v68
    %v75 = vunpack.c.l.b16 %v55
    %v76 = vunpack.c.l.b16 %v56
    %v77 = vunpack.c.l.b16 %v57
    %v78 = vunpack.c.l.b16 %v58
    %v79 = vpack.c.b16 %v76, %v75
    %v80 = vpack.c.b16 %v78, %v77
    %vm83 = vcmask 261120
    %v85 = vsel %vm83, %v70, 0
    %87 = vmatprep.subr.bf16.mxu0 0
    %88 = vmatpush1.bf16.msra.mxu0 0
    %89 = vmatprep.subr.bf16.mxu0 0
    %90 = vmatpush1.bf16.msra.mxu0 0
    %91 = vmatprep.subr.bf16.mxu0 0
    %92 = vmatpush1.bf16.msra.mxu0 0
    %93 = vmatprep.subr.bf16.mxu0 0
    %94 = vmatpush1.bf16.msra.mxu0 0
    %95 = vmatprep.subr.bf16.mxu0 0
    %96 = vmatpush1.bf16.msra.mxu0 0
    %97 = vmatprep.subr.bf16.mxu0 0
    %98 = vmatpush1.bf16.msra.mxu0 0
    %99 = vmatprep.subr.bf16.mxu0 0
    %100 = vmatpush1.bf16.msra.mxu0 %v80
    %101 = vmatprep.subr.bf16.mxu0 0
    %102 = vmatpush1.bf16.msra.mxu0 %v79
    %103 = vmatprep.subr.bf16.mxu0 0
    %104 = vmatpush2.bf16.msra.mxu0 0
    %105 = vmatprep.subr.bf16.mxu0 0
    %106 = vmatpush2.bf16.msra.mxu0 0
    %107 = vmatprep.subr.bf16.mxu0 0
    %108 = vmatpush2.bf16.msra.mxu0 0
    %109 = vmatprep.subr.bf16.mxu0 0
    %110 = vmatpush2.bf16.msra.mxu0 0
    %111 = vmatprep.subr.bf16.mxu0 0
    %112 = vmatpush2.bf16.msra.mxu0 0
    %113 = vmatprep.subr.bf16.mxu0 0
    %114 = vmatpush2.bf16.msra.mxu0 0
    %115 = vmatprep.subr.bf16.mxu0 0
    %116 = vmatpush2.bf16.msra.mxu0 0
    %117 = vmatprep.subr.bf16.mxu0 0
    %118 = vmatpush2.bf16.msra.mxu0 0
    %119 = vmatprep.mubr.bf16.mxu0 0
    %120 = vmatmul.mubr.bf16.gmra.mxu0 %v85
    %v121 = vpop.f32.mrf.mxu0
    %v122 = vadd.f32 %v65, %v121
    %v123 = vpop.f32.mrf.mxu0
    %v124 = vpop.f32.mrf.mxu0
    %v125 = vadd.f32 %v65, %v124
    %v126 = vpop.f32.mrf.mxu0
    %127 = vdwg.mxu0
    %v128 = vmax.f32 %v122, 0.0
    %v129 = vmax.f32 %v125, 0.0
    %v130 = vpack.c.bf16 %v129, %v128
    %s131 = scalar_lea.vmem [#allocation5], 64
    %v132 = vld [vmem:[%s131] sm:$0xf]
    %v133 = vld [vmem:[%s131 + $0x4] sm:$0xf]
    %v134 = vld [vmem:[%s131 + $0x8] sm:$0xf]
    %v135 = vld [vmem:[%s131 + $0xc] sm:$0xf]
    %v136 = vld [vmem:[%s131 + $0x10] sm:$0xf]
    %v137 = vld [vmem:[%s131 + $0x14] sm:$0xf]
    %v138 = vld [vmem:[%s131 + $0x18] sm:$0xf]
    %v139 = vld [vmem:[%s131 + $0x1c] sm:$0xf]
    %v140 = vld [vmem:[%s131 + $0x20] sm:$0xf]
    %v141 = vld [vmem:[%s131 + $0x24] sm:$0xf]
    %v142 = vld [vmem:[%s131 + $0x28] sm:$0xf]
    %v143 = vld [vmem:[%s131 + $0x2c] sm:$0xf]
    %v144 = vld [vmem:[%s131 + $0x30] sm:$0xf]
    %v145 = vld [vmem:[%s131 + $0x34] sm:$0xf]
    %v146 = vld [vmem:[%s131 + $0x38] sm:$0xf]
    %v147 = vld [vmem:[%s131 + $0x3c] sm:$0xf]
    %v148 = vld [vmem:[#allocation7 + $0x1] sm:$0x1]
    %v149 = vlaneseq
    %v150 = vshrl.u32 %v149, 7
    %v151 = vsub.s32 0, %v150
    %v152 = vrot.slane %v148, %v151
    %v169 = vunpack.c.l.b16 %v132
    %v170 = vunpack.c.l.b16 %v133
    %v171 = vunpack.c.l.b16 %v134
    %v172 = vunpack.c.l.b16 %v135
    %v173 = vunpack.c.l.b16 %v136
    %v174 = vunpack.c.l.b16 %v137
    %v175 = vunpack.c.l.b16 %v138
    %v176 = vunpack.c.l.b16 %v139
    %v177 = vunpack.c.l.b16 %v140
    %v178 = vunpack.c.l.b16 %v141
    %v179 = vunpack.c.l.b16 %v142
    %v180 = vunpack.c.l.b16 %v143
    %v181 = vunpack.c.l.b16 %v144
    %v182 = vunpack.c.l.b16 %v145
    %v183 = vunpack.c.l.b16 %v146
    %v184 = vunpack.c.l.b16 %v147
    %v185 = vpack.c.b16 %v170, %v169
    %v186 = vpack.c.b16 %v172, %v171
    %v187 = vpack.c.b16 %v174, %v173
    %v188 = vpack.c.b16 %v176, %v175
    %v189 = vpack.c.b16 %v178, %v177
    %v190 = vpack.c.b16 %v180, %v179
    %v191 = vpack.c.b16 %v182, %v181
    %v192 = vpack.c.b16 %v184, %v183
    %201 = vmatprep.subr.bf16.mxu0 0
    %202 = vmatpush1.bf16.msra.mxu0 %v192
    %203 = vmatprep.subr.bf16.mxu0 0
    %204 = vmatpush1.bf16.msra.mxu0 %v191
    %205 = vmatprep.subr.bf16.mxu0 0
    %206 = vmatpush1.bf16.msra.mxu0 %v190
    %207 = vmatprep.subr.bf16.mxu0 0
    %208 = vmatpush1.bf16.msra.mxu0 %v189
    %209 = vmatprep.subr.bf16.mxu0 0
    %210 = vmatpush1.bf16.msra.mxu0 %v188
    %211 = vmatprep.subr.bf16.mxu0 0
    %212 = vmatpush1.bf16.msra.mxu0 %v187
    %213 = vmatprep.subr.bf16.mxu0 0
    %214 = vmatpush1.bf16.msra.mxu0 %v186
    %215 = vmatprep.subr.bf16.mxu0 0
    %216 = vmatpush1.bf16.msra.mxu0 %v185
    %217 = vmatprep.subr.bf16.mxu0 0
    %218 = vmatpush2.bf16.msra.mxu0 0
    %219 = vmatprep.subr.bf16.mxu0 0
    %220 = vmatpush2.bf16.msra.mxu0 0
    %221 = vmatprep.subr.bf16.mxu0 0
    %222 = vmatpush2.bf16.msra.mxu0 0
    %223 = vmatprep.subr.bf16.mxu0 0
    %224 = vmatpush2.bf16.msra.mxu0 0
    %225 = vmatprep.subr.bf16.mxu0 0
    %226 = vmatpush2.bf16.msra.mxu0 0
    %227 = vmatprep.subr.bf16.mxu0 0
    %228 = vmatpush2.bf16.msra.mxu0 0
    %229 = vmatprep.subr.bf16.mxu0 0
    %230 = vmatpush2.bf16.msra.mxu0 0
    %231 = vmatprep.subr.bf16.mxu0 0
    %232 = vmatpush2.bf16.msra.mxu0 0
    %233 = vmatprep.mubr.bf16.mxu0 0
    %234 = vmatmul.mubr.bf16.gmra.mxu0 %v130
    %v235 = vpop.f32.mrf.mxu0
    %v236 = vadd.f32 %v152, %v235
    %v237 = vpop.f32.mrf.mxu0
    %v238 = vpop.f32.mrf.mxu0
    %v239 = vadd.f32 %v152, %v238
    %v240 = vpop.f32.mrf.mxu0
    %241 = vdwg.mxu0
    %v242 = vmax.f32 %v236, 0.0
    %v243 = vmax.f32 %v239, 0.0
    %v244 = vpack.c.bf16 %v243, %v242
    %s245 = scalar_lea.vmem [#allocation5], 128
    %v246 = vld [vmem:[%s245] sm:$0xf]
    %v247 = vld [vmem:[%s245 + $0x4] sm:$0xf]
    %v248 = vld [vmem:[%s245 + $0x8] sm:$0xf]
    %v249 = vld [vmem:[%s245 + $0xc] sm:$0xf]
    %v250 = vld [vmem:[%s245 + $0x10] sm:$0xf]
    %v251 = vld [vmem:[%s245 + $0x14] sm:$0xf]
    %v252 = vld [vmem:[%s245 + $0x18] sm:$0xf]
    %v253 = vld [vmem:[%s245 + $0x1c] sm:$0xf]
    %v254 = vld [vmem:[%s245 + $0x20] sm:$0xf]
    %v255 = vld [vmem:[%s245 + $0x24] sm:$0xf]
    %v256 = vld [vmem:[%s245 + $0x28] sm:$0xf]
    %v257 = vld [vmem:[%s245 + $0x2c] sm:$0xf]
    %v258 = vld [vmem:[%s245 + $0x30] sm:$0xf]
    %v259 = vld [vmem:[%s245 + $0x34] sm:$0xf]
    %v260 = vld [vmem:[%s245 + $0x38] sm:$0xf]
    %v261 = vld [vmem:[%s245 + $0x3c] sm:$0xf]
    %v262 = vld [vmem:[#allocation7 + $0x2] sm:$0x1]
    %v263 = vlaneseq
    %v264 = vshrl.u32 %v263, 7
    %v265 = vsub.s32 0, %v264
    %v266 = vrot.slane %v262, %v265
    %v283 = vunpack.c.l.b16 %v246
    %v284 = vunpack.c.l.b16 %v247
    %v285 = vunpack.c.l.b16 %v248
    %v286 = vunpack.c.l.b16 %v249
    %v287 = vunpack.c.l.b16 %v250
    %v288 = vunpack.c.l.b16 %v251
    %v289 = vunpack.c.l.b16 %v252
    %v290 = vunpack.c.l.b16 %v253
    %v291 = vunpack.c.l.b16 %v254
    %v292 = vunpack.c.l.b16 %v255
    %v293 = vunpack.c.l.b16 %v256
    %v294 = vunpack.c.l.b16 %v257
    %v295 = vunpack.c.l.b16 %v258
    %v296 = vunpack.c.l.b16 %v259
    %v297 = vunpack.c.l.b16 %v260
    %v298 = vunpack.c.l.b16 %v261
    %v299 = vpack.c.b16 %v284, %v283
    %v300 = vpack.c.b16 %v286, %v285
    %v301 = vpack.c.b16 %v288, %v287
    %v302 = vpack.c.b16 %v290, %v289
    %v303 = vpack.c.b16 %v292, %v291
    %v304 = vpack.c.b16 %v294, %v293
    %v305 = vpack.c.b16 %v296, %v295
    %v306 = vpack.c.b16 %v298, %v297
    %315 = vmatprep.subr.bf16.mxu0 0
    %316 = vmatpush1.bf16.msra.mxu0 %v306
    %317 = vmatprep.subr.bf16.mxu0 0
    %318 = vmatpush1.bf16.msra.mxu0 %v305
    %319 = vmatprep.subr.bf16.mxu0 0
    %320 = vmatpush1.bf16.msra.mxu0 %v304
    %321 = vmatprep.subr.bf16.mxu0 0
    %322 = vmatpush1.bf16.msra.mxu0 %v303
    %323 = vmatprep.subr.bf16.mxu0 0
    %324 = vmatpush1.bf16.msra.mxu0 %v302
    %325 = vmatprep.subr.bf16.mxu0 0
    %326 = vmatpush1.bf16.msra.mxu0 %v301
    %327 = vmatprep.subr.bf16.mxu0 0
    %328 = vmatpush1.bf16.msra.mxu0 %v300
    %329 = vmatprep.subr.bf16.mxu0 0
    %330 = vmatpush1.bf16.msra.mxu0 %v299
    %331 = vmatprep.subr.bf16.mxu0 0
    %332 = vmatpush2.bf16.msra.mxu0 0
    %333 = vmatprep.subr.bf16.mxu0 0
    %334 = vmatpush2.bf16.msra.mxu0 0
    %335 = vmatprep.subr.bf16.mxu0 0
    %336 = vmatpush2.bf16.msra.mxu0 0
    %337 = vmatprep.subr.bf16.mxu0 0
    %338 = vmatpush2.bf16.msra.mxu0 0
    %339 = vmatprep.subr.bf16.mxu0 0
    %340 = vmatpush2.bf16.msra.mxu0 0
    %341 = vmatprep.subr.bf16.mxu0 0
    %342 = vmatpush2.bf16.msra.mxu0 0
    %343 = vmatprep.subr.bf16.mxu0 0
    %344 = vmatpush2.bf16.msra.mxu0 0
    %345 = vmatprep.subr.bf16.mxu0 0
    %346 = vmatpush2.bf16.msra.mxu0 0
    %347 = vmatprep.mubr.bf16.mxu0 0
    %348 = vmatmul.mubr.bf16.gmra.mxu0 %v244
    %v349 = vpop.f32.mrf.mxu0
    %v350 = vadd.f32 %v266, %v349
    %v351 = vpop.f32.mrf.mxu0
    %v352 = vpop.f32.mrf.mxu0
    %v353 = vadd.f32 %v266, %v352
    %v354 = vpop.f32.mrf.mxu0
    %355 = vdwg.mxu0
    %v356 = vmax.f32 %v350, 0.0
    %v357 = vmax.f32 %v353, 0.0
    %v358 = vpack.c.bf16 %v357, %v356
    %s359 = scalar_lea.vmem [#allocation5], 192
    %v360 = vld [vmem:[%s359] sm:$0xf]
    %v361 = vld [vmem:[%s359 + $0x4] sm:$0xf]
    %v362 = vld [vmem:[%s359 + $0x8] sm:$0xf]
    %v363 = vld [vmem:[%s359 + $0xc] sm:$0xf]
    %v364 = vld [vmem:[%s359 + $0x10] sm:$0xf]
    %v365 = vld [vmem:[%s359 + $0x14] sm:$0xf]
    %v366 = vld [vmem:[%s359 + $0x18] sm:$0xf]
    %v367 = vld [vmem:[%s359 + $0x1c] sm:$0xf]
    %v368 = vld [vmem:[%s359 + $0x20] sm:$0xf]
    %v369 = vld [vmem:[%s359 + $0x24] sm:$0xf]
    %v370 = vld [vmem:[%s359 + $0x28] sm:$0xf]
    %v371 = vld [vmem:[%s359 + $0x2c] sm:$0xf]
    %v372 = vld [vmem:[%s359 + $0x30] sm:$0xf]
    %v373 = vld [vmem:[%s359 + $0x34] sm:$0xf]
    %v374 = vld [vmem:[%s359 + $0x38] sm:$0xf]
    %v375 = vld [vmem:[%s359 + $0x3c] sm:$0xf]
    %v376 = vld [vmem:[#allocation7 + $0x3] sm:$0x1]
    %v377 = vlaneseq
    %v378 = vshrl.u32 %v377, 7
    %v379 = vsub.s32 0, %v378
    %v380 = vrot.slane %v376, %v379
    %v397 = vunpack.c.l.b16 %v360
    %v398 = vunpack.c.l.b16 %v361
    %v399 = vunpack.c.l.b16 %v362
    %v400 = vunpack.c.l.b16 %v363
    %v401 = vunpack.c.l.b16 %v364
    %v402 = vunpack.c.l.b16 %v365
    %v403 = vunpack.c.l.b16 %v366
    %v404 = vunpack.c.l.b16 %v367
    %v405 = vunpack.c.l.b16 %v368
    %v406 = vunpack.c.l.b16 %v369
    %v407 = vunpack.c.l.b16 %v370
    %v408 = vunpack.c.l.b16 %v371
    %v409 = vunpack.c.l.b16 %v372
    %v410 = vunpack.c.l.b16 %v373
    %v411 = vunpack.c.l.b16 %v374
    %v412 = vunpack.c.l.b16 %v375
    %v413 = vpack.c.b16 %v398, %v397
    %v414 = vpack.c.b16 %v400, %v399
    %v415 = vpack.c.b16 %v402, %v401
    %v416 = vpack.c.b16 %v404, %v403
    %v417 = vpack.c.b16 %v406, %v405
    %v418 = vpack.c.b16 %v408, %v407
    %v419 = vpack.c.b16 %v410, %v409
    %v420 = vpack.c.b16 %v412, %v411
    %429 = vmatprep.subr.bf16.mxu0 0
    %430 = vmatpush1.bf16.msra.mxu0 %v420
    %431 = vmatprep.subr.bf16.mxu0 0
    %432 = vmatpush1.bf16.msra.mxu0 %v419
    %433 = vmatprep.subr.bf16.mxu0 0
    %434 = vmatpush1.bf16.msra.mxu0 %v418
    %435 = vmatprep.subr.bf16.mxu0 0
    %436 = vmatpush1.bf16.msra.mxu0 %v417
    %437 = vmatprep.subr.bf16.mxu0 0
    %438 = vmatpush1.bf16.msra.mxu0 %v416
    %439 = vmatprep.subr.bf16.mxu0 0
    %440 = vmatpush1.bf16.msra.mxu0 %v415
    %441 = vmatprep.subr.bf16.mxu0 0
    %442 = vmatpush1.bf16.msra.mxu0 %v414
    %443 = vmatprep.subr.bf16.mxu0 0
    %444 = vmatpush1.bf16.msra.mxu0 %v413
    %445 = vmatprep.subr.bf16.mxu0 0
    %446 = vmatpush2.bf16.msra.mxu0 0
    %447 = vmatprep.subr.bf16.mxu0 0
    %448 = vmatpush2.bf16.msra.mxu0 0
    %449 = vmatprep.subr.bf16.mxu0 0
    %450 = vmatpush2.bf16.msra.mxu0 0
    %451 = vmatprep.subr.bf16.mxu0 0
    %452 = vmatpush2.bf16.msra.mxu0 0
    %453 = vmatprep.subr.bf16.mxu0 0
    %454 = vmatpush2.bf16.msra.mxu0 0
    %455 = vmatprep.subr.bf16.mxu0 0
    %456 = vmatpush2.bf16.msra.mxu0 0
    %457 = vmatprep.subr.bf16.mxu0 0
    %458 = vmatpush2.bf16.msra.mxu0 0
    %459 = vmatprep.subr.bf16.mxu0 0
    %460 = vmatpush2.bf16.msra.mxu0 0
    %461 = vmatprep.mubr.bf16.mxu0 0
    %462 = vmatmul.mubr.bf16.gmra.mxu0 %v358
    %v463 = vpop.f32.mrf.mxu0
    %v464 = vadd.f32 %v380, %v463
    %v465 = vpop.f32.mrf.mxu0
    %v466 = vpop.f32.mrf.mxu0
    %v467 = vadd.f32 %v380, %v466
    %v468 = vpop.f32.mrf.mxu0
    %469 = vdwg.mxu0
    %v470 = vmax.f32 %v464, 0.0
    %v471 = vmax.f32 %v467, 0.0
    %v472 = vpack.c.bf16 %v471, %v470
    %s473 = scalar_lea.vmem [#allocation5], 256
    %v474 = vld [vmem:[%s473] sm:$0xf]
    %v475 = vld [vmem:[%s473 + $0x4] sm:$0xf]
    %v476 = vld [vmem:[%s473 + $0x8] sm:$0xf]
    %v477 = vld [vmem:[%s473 + $0xc] sm:$0xf]
    %v478 = vld [vmem:[%s473 + $0x10] sm:$0xf]
    %v479 = vld [vmem:[%s473 + $0x14] sm:$0xf]
    %v480 = vld [vmem:[%s473 + $0x18] sm:$0xf]
    %v481 = vld [vmem:[%s473 + $0x1c] sm:$0xf]
    %v482 = vld [vmem:[%s473 + $0x20] sm:$0xf]
    %v483 = vld [vmem:[%s473 + $0x24] sm:$0xf]
    %v484 = vld [vmem:[%s473 + $0x28] sm:$0xf]
    %v485 = vld [vmem:[%s473 + $0x2c] sm:$0xf]
    %v486 = vld [vmem:[%s473 + $0x30] sm:$0xf]
    %v487 = vld [vmem:[%s473 + $0x34] sm:$0xf]
    %v488 = vld [vmem:[%s473 + $0x38] sm:$0xf]
    %v489 = vld [vmem:[%s473 + $0x3c] sm:$0xf]
    %v490 = vld [vmem:[#allocation7 + $0x4] sm:$0x1]
    %v491 = vlaneseq
    %v492 = vshrl.u32 %v491, 7
    %v493 = vsub.s32 0, %v492
    %v494 = vrot.slane %v490, %v493
    %v511 = vunpack.c.l.b16 %v474
    %v512 = vunpack.c.l.b16 %v475
    %v513 = vunpack.c.l.b16 %v476
    %v514 = vunpack.c.l.b16 %v477
    %v515 = vunpack.c.l.b16 %v478
    %v516 = vunpack.c.l.b16 %v479
    %v517 = vunpack.c.l.b16 %v480
    %v518 = vunpack.c.l.b16 %v481
    %v519 = vunpack.c.l.b16 %v482
    %v520 = vunpack.c.l.b16 %v483
    %v521 = vunpack.c.l.b16 %v484
    %v522 = vunpack.c.l.b16 %v485
    %v523 = vunpack.c.l.b16 %v486
    %v524 = vunpack.c.l.b16 %v487
    %v525 = vunpack.c.l.b16 %v488
    %v526 = vunpack.c.l.b16 %v489
    %v527 = vpack.c.b16 %v512, %v511
    %v528 = vpack.c.b16 %v514, %v513
    %v529 = vpack.c.b16 %v516, %v515
    %v530 = vpack.c.b16 %v518, %v517
    %v531 = vpack.c.b16 %v520, %v519
    %v532 = vpack.c.b16 %v522, %v521
    %v533 = vpack.c.b16 %v524, %v523
    %v534 = vpack.c.b16 %v526, %v525
    %543 = vmatprep.subr.bf16.mxu0 0
    %544 = vmatpush1.bf16.msra.mxu0 %v534
    %545 = vmatprep.subr.bf16.mxu0 0
    %546 = vmatpush1.bf16.msra.mxu0 %v533
    %547 = vmatprep.subr.bf16.mxu0 0
    %548 = vmatpush1.bf16.msra.mxu0 %v532
    %549 = vmatprep.subr.bf16.mxu0 0
    %550 = vmatpush1.bf16.msra.mxu0 %v531
    %551 = vmatprep.subr.bf16.mxu0 0
    %552 = vmatpush1.bf16.msra.mxu0 %v530
    %553 = vmatprep.subr.bf16.mxu0 0
    %554 = vmatpush1.bf16.msra.mxu0 %v529
    %555 = vmatprep.subr.bf16.mxu0 0
    %556 = vmatpush1.bf16.msra.mxu0 %v528
    %557 = vmatprep.subr.bf16.mxu0 0
    %558 = vmatpush1.bf16.msra.mxu0 %v527
    %559 = vmatprep.subr.bf16.mxu0 0
    %560 = vmatpush2.bf16.msra.mxu0 0
    %561 = vmatprep.subr.bf16.mxu0 0
    %562 = vmatpush2.bf16.msra.mxu0 0
    %563 = vmatprep.subr.bf16.mxu0 0
    %564 = vmatpush2.bf16.msra.mxu0 0
    %565 = vmatprep.subr.bf16.mxu0 0
    %566 = vmatpush2.bf16.msra.mxu0 0
    %567 = vmatprep.subr.bf16.mxu0 0
    %568 = vmatpush2.bf16.msra.mxu0 0
    %569 = vmatprep.subr.bf16.mxu0 0
    %570 = vmatpush2.bf16.msra.mxu0 0
    %571 = vmatprep.subr.bf16.mxu0 0
    %572 = vmatpush2.bf16.msra.mxu0 0
    %573 = vmatprep.subr.bf16.mxu0 0
    %574 = vmatpush2.bf16.msra.mxu0 0
    %575 = vmatprep.mubr.bf16.mxu0 0
    %576 = vmatmul.mubr.bf16.gmra.mxu0 %v472
    %v577 = vpop.f32.mrf.mxu0
    %v578 = vadd.f32 %v494, %v577
    %v579 = vpop.f32.mrf.mxu0
    %v580 = vpop.f32.mrf.mxu0
    %v581 = vadd.f32 %v494, %v580
    %v582 = vpop.f32.mrf.mxu0
    %583 = vdwg.mxu0
    %v584 = vpack.c.bf16 %v581, %v578
    %v586 = vunpack.c.l.b16 %v584
    %v587 = vunpack.c.h.b16 %v584
    %v588 = vpack.c.b16 %v586, %v586
    %v589 = vpack.c.b16 %v587, %v587
    %592 = vst [vmem:[#allocation8] sm:$0xf] %v588
    %593 = vst [vmem:[#allocation8 + $0x4] sm:$0xf] %v589
    // Predicated region
    $region26: #{tpu_custom_call.1} parent=1 // pred_check
      _
    $region27: #{tpu_custom_call.1} parent=1 // pred_check_branch
      %595 = sbr.rel (0) target = $region29
    $region28: #{tpu_custom_call.1} parent=1 // pred_region
      %s597 = ssub.s32 128, 128
      %598 = vsyncadd [#allocation4], %s597
      %s599 = sshll.u32 [#allocation8], 4
      %s600 = int_to_ptr.vmem [resolvable:$true] %s599
      %605 = dma.vmem_to_hbm [thread:$0]  %s600, 128, %s3, [#allocation4], 64, 64, 4
    $region29: #{tpu_custom_call.1} parent=1 // pred_fallthru
      _
    // Predicated region
    $region30: #{tpu_custom_call.1} parent=1 // pred_check
      _
    $region31: #{tpu_custom_call.1} parent=1 // pred_check_branch
      %607 = sbr.rel (0) target = $region33
    $region32: #{tpu_custom_call.1} parent=1 // pred_region
      %608 = dma.done [#allocation4], 128
    $region33: #{tpu_custom_call.1} parent=1 // pred_fallthru
      _
    %609 = vsyncpa [#allocation3], 1
    %610 = vsyncpa [#allocation6], 1
    %611 = vsyncpa [#allocation4], 1

</llo_original>
